<compile_context>
chip_gen: v6e
topology: v6e:2x2x1
jax: 0.10.0
libtpu: 0.0.40
codegen_flags: <defaults>
</compile_context>

<pallas_src>
import jax
import jax.numpy as jnp
from jax.experimental import pallas as pl
from jax.experimental.pallas import tpu as pltpu


# ----------------------------- Pallas kernels ------------------------------

def _mlp_kernel(xt_ref, wb_ref, o_ref):
    # Fused linear->linear1->linear3->linear4 chain, lane-dense output:
    #   o (1, B) = sum_k xt(k, :) * w(k)  + b
    # xt_ref: (3, B)  -- batch on the lane axis
    # wb_ref: (4, 1)  -- rows 0..2 = fused weight column, row 3 = fused bias
    xt = xt_ref[...]
    wb = wb_ref[...]
    w = wb[0:3, :]                                    # (3, 1)
    b = wb[3:4, :]                                    # (1, 1)
    y = jnp.sum(xt * w, axis=0, keepdims=True) + b    # (1, B), VPU + sublane reduce
    o_ref[...] = y.astype(o_ref.dtype)


def _rnn_kernel(x_ref, wih0_ref, b0_ref, whh0_ref, wih1_ref, whh1_ref, b1_ref,
                w4_ref, b4_ref, x1_ref, out1_ref):
    # 2-layer tanh RNN (input=1, hidden=2, batch=3) over seq = x_ref.shape[0].
    # Parity-only path (its result is dead code in the PyTorch forward).
    seq = x_ref.shape[0]

    # Hoist all non-recurrent work: input_size == 1, so x_t @ W_ih0 is a
    # broadcast multiply.  Both per-layer bias pairs are pre-summed.
    pre0 = x_ref[...] * wih0_ref[...] + b0_ref[...]    # (seq, 3, 2)
    whh0 = whh0_ref[...]                               # (2, 2)
    wih1 = wih1_ref[...]                               # (2, 2)
    whh1 = whh1_ref[...]                               # (2, 2)
    b1 = b1_ref[...]                                   # (1, 2)

    def small_matmul(h, w):
        # (3,2) @ (2,2) via 2 broadcast-multiplies + add: no MXU push/pop
        # latency on the serial recurrence chain.
        return h[:, 0:1] * w[0:1, :] + h[:, 1:2] * w[1:2, :]

    h0 = jnp.zeros((3, 2), jnp.float32)
    h1 = jnp.zeros((3, 2), jnp.float32)
    h1_steps = []
    # seq is a static 8: fully unrolled; only VPU adds/muls + EUP tanh remain
    # on the serial chain.  Hidden state stays in vregs (no per-step stores).
    for t in range(seq):
        h0 = jnp.tanh(pre0[t] + small_matmul(h0, whh0))
        h1 = jnp.tanh(small_matmul(h0, wih1) + small_matmul(h1, whh1) + b1)
        h1_steps.append(h1)

    x1_all = jnp.stack(h1_steps, axis=0)               # (seq, 3, 2), in vregs
    x1_ref[...] = x1_all.astype(x1_ref.dtype)          # single full store

    # linear4 over the whole sequence from the in-register stack.
    out1 = jnp.sum(x1_all * w4_ref[...], axis=-1, keepdims=True) + b4_ref[...]
    out1_ref[...] = out1.astype(out1_ref.dtype)


# ------------------------------- wrappers -----------------------------------

_VMEM = pl.BlockSpec(memory_space=pltpu.MemorySpace.VMEM)


def prepare_fused_params(p):
    """Fold the activation-free 4-layer chain into one (4,1) operand.

    Done ONCE at parameter-load time (not per forward call):
      rows 0..2 : W0 @ W1 @ W3 @ W4                      (3, 1)
      row  3    : ((b0 W1 + b1) W3 + b3) W4 + b4         (1, 1)
    """
    w = p["w0"] @ p["w1"] @ p["w3"] @ p["w4"]
    b = ((p["b0"] @ p["w1"] + p["b1"]) @ p["w3"] + p["b3"]) @ p["w4"] + p["b4"]
    return jnp.concatenate([w, b], axis=0)              # (4, 1)


def mlp_forward(xt, wb):
    # xt: (3, B) lane-dense input, wb: (4, 1) fused weight+bias.
    # TODO(synk): if B ever grows past the scoped-VMEM budget, add a grid over
    # the lane (batch) axis with BlockSpec tiles and
    # dimension_semantics=("parallel",) (tiles ~2x smaller on v7x's 64 MiB VMEM).
    return pl.pallas_call(
        _mlp_kernel,
        out_shape=jax.ShapeDtypeStruct((1, xt.shape[1]), jnp.float32),
        in_specs=[_VMEM, _VMEM],
        out_specs=_VMEM,
    )(xt, wb)


def forward(x, wb):
    # Mirrors the PyTorch forward's *returned value*: the RNN branch result is
    # discarded by the module, so it is not computed on the hot path.
    out_row = mlp_forward(x.T, wb)          # (1, B) lane-dense
    return out_row.reshape(x.shape[0], 1)   # (B, 1), matches PyTorch output


def rnn_branch_forward(x, p):
    # Optional: the module's dead-code nn.RNN + linear4 path, for parity only.
    seq = x.shape[0]
    x_seq = x.reshape(seq, 3, 1)                 # (seq, batch=3, input=1)
    b0sum = p["bih0"] + p["bhh0"]                # fold the two layer-0 biases
    b1sum = p["bih1"] + p["bhh1"]                # fold the two layer-1 biases
    w4_row = p["w4"].T                           # (1, 2)
    args = (x_seq, p["wih0"], b0sum, p["whh0"], p["wih1"], p["whh1"], b1sum,
            w4_row, p["b4"])
    x1, out1 = pl.pallas_call(
        _rnn_kernel,
        out_shape=(jax.ShapeDtypeStruct((seq, 3, 2), jnp.float32),
                   jax.ShapeDtypeStruct((seq, 3, 1), jnp.float32)),
        in_specs=[_VMEM] * len(args),
        out_specs=(_VMEM, _VMEM),
    )(*args)
    return x1, out1


# ------------------------- deterministic parameters --------------------------

def init_params(key):
    def uniform(k, shape, fan_in):
        bound = 1.0 / (fan_in ** 0.5)
        return jax.random.uniform(k, shape, jnp.float32, -bound, bound)

    ks = jax.random.split(key, 16)
    return {
        # Linear weights stored transposed as (in, out); biases as (1, out).
        "w0": uniform(ks[0], (3, 10), 3),  "b0": uniform(ks[1], (1, 10), 3),
        "w1": uniform(ks[2], (10, 8), 10), "b1": uniform(ks[3], (1, 8), 10),
        "w3": uniform(ks[4], (8, 2), 8),   "b3": uniform(ks[5], (1, 2), 8),
        "w4": uniform(ks[6], (2, 1), 2),   "b4": uniform(ks[7], (1, 1), 2),
        # nn.RNN(1, 2, 2) parameters, transposed to (in, out) / hidden (2, 2).
        "wih0": uniform(ks[8], (1, 2), 2),  "whh0": uniform(ks[9], (2, 2), 2),
        "bih0": uniform(ks[10], (1, 2), 2), "bhh0": uniform(ks[11], (1, 2), 2),
        "wih1": uniform(ks[12], (2, 2), 2), "whh1": uniform(ks[13], (2, 2), 2),
        "bih1": uniform(ks[14], (1, 2), 2), "bhh1": uniform(ks[15], (1, 2), 2),
    }


# ----------------------------- pure-JAX reference ----------------------------

def reference_forward(x, p):
    h = x @ p["w0"] + p["b0"]
    h = h @ p["w1"] + p["b1"]
    h = h @ p["w3"] + p["b3"]
    return h @ p["w4"] + p["b4"]


def reference_rnn(x, p):
    b = x.shape[0]
    xs = x.reshape(b, 3, 1)
    h0 = jnp.zeros((3, 2), jnp.float32)
    h1 = jnp.zeros((3, 2), jnp.float32)
    outs = []
    for t in range(b):
        h0 = jnp.tanh(xs[t] @ p["wih0"] + p["bih0"] + h0 @ p["whh0"] + p["bhh0"])
        h1 = jnp.tanh(h0 @ p["wih1"] + p["bih1"] + h1 @ p["whh1"] + p["bhh1"])
        outs.append(h1)
    return jnp.stack(outs, axis=0)


# ----------------------------------- main ------------------------------------

if __name__ == "__main__":
    key = jax.random.PRNGKey(0)
    k_param, k_x = jax.random.split(key)
    params = init_params(k_param)

    # Fused parameters built once, at parameter-load time (not per call).
    wb = jax.block_until_ready(prepare_fused_params(params))

    batch = 8
    x = jax.random.normal(k_x, (batch, 3), dtype=jnp.float32)

    # Hot path: single pallas_call (2 input DMAs, lane-dense output).
    fwd = jax.jit(forward)
    out = jax.block_until_ready(fwd(x, wb))
    assert out.shape == (batch, 1)
    ref = reference_forward(x, params)
    assert jnp.allclose(out, ref, atol=1e-4, rtol=1e-4)

    # Parity check of the module's dead-code RNN branch (not part of forward;
    # the PyTorch module discards its result too).
    x1, out1 = rnn_branch_forward(x, params)
    jax.block_until_ready((x1, out1))
    x1_ref_val = reference_rnn(x, params)
    assert jnp.allclose(x1, x1_ref_val, atol=1e-4, rtol=1e-4)
    out1_ref_val = x1_ref_val @ params["w4"] + params["b4"]
    assert jnp.allclose(out1, out1_ref_val, atol=1e-4, rtol=1e-4)

    print("KERNEL_OK")
</pallas_src>

<mosaic_0001>
module attributes {stable_mosaic.version = 11 : i64} {
  func.func @_mlp_kernel(%arg0: memref<3x8xf32, #tpu.memory_space<vmem>>, %arg1: memref<4x1xf32, #tpu.memory_space<vmem>>, %arg2: memref<1x8xf32, #tpu.memory_space<vmem>>) attributes {dimension_semantics = [], scalar_prefetch = 0 : i64, scratch_operands = 0 : i64, tpu.core_type = #tpu.core_type<tc>} {
    %c0 = arith.constant 0 : index
    %c0_0 = arith.constant 0 : index
    %0 = vector.load %arg0[%c0, %c0_0] : memref<3x8xf32, #tpu.memory_space<vmem>>, vector<3x8xf32>
    %c0_1 = arith.constant 0 : index
    %c0_2 = arith.constant 0 : index
    %1 = vector.load %arg1[%c0_1, %c0_2] : memref<4x1xf32, #tpu.memory_space<vmem>>, vector<4x1xf32>
    %2 = vector.extract_strided_slice %1 {offsets = [0, 0], sizes = [3, 1], strides = [1, 1]} : vector<4x1xf32> to vector<3x1xf32>
    %3 = vector.extract_strided_slice %1 {offsets = [3, 0], sizes = [1, 1], strides = [1, 1]} : vector<4x1xf32> to vector<1x1xf32>
    %4 = vector.broadcast %2 : vector<3x1xf32> to vector<3x8xf32>
    %5 = arith.mulf %0, %4 : vector<3x8xf32>
    %cst = arith.constant dense<0.000000e+00> : vector<8xf32>
    %6 = vector.multi_reduction <add>, %5, %cst [0] : vector<3x8xf32> to vector<8xf32>
    %7 = vector.shape_cast %6 : vector<8xf32> to vector<1x8xf32>
    %8 = vector.broadcast %3 : vector<1x1xf32> to vector<1x8xf32>
    %9 = arith.addf %7, %8 : vector<1x8xf32>
    %c0_3 = arith.constant 0 : index
    %c0_4 = arith.constant 0 : index
    %10 = vector.load %arg2[%c0_3, %c0_4] : memref<1x8xf32, #tpu.memory_space<vmem>>, vector<1x8xf32>
    tpu.vector_store %arg2[%c0_3, %c0_4], %9 {strides = array<i32>} : memref<1x8xf32, #tpu.memory_space<vmem>>, vector<1x8xf32>,
    return
  }
}

</mosaic_0001>

<llo_original>
// kernel: forward.1
$region0: #{forward.1}
  #allocation0 [shape = 'u32[]', space=smem, size = 0x4, offset = 0x4, fixed_abs, tag = 'smem constant byte address 0x4 - core index']
  #allocation1 [shape = 'u32[144,128]{1,0:T(1,128)}', space=vmem, size = 0x12000, scoped, tag = 'internal scratch']
  %s0 = inlined_call_operand.vmem [shape: f32[3,8], index: 0, kind: input, shape index: {}]
  %s1 = inlined_call_operand.vmem [shape: f32[4,1], index: 1, kind: input, shape index: {}]
  %s2 = inlined_call_operand.hbm [shape: f32[1,8], index: 2, kind: output, shape index: {}]
  %s3 = sld [smem:[#allocation0]]
  $region18: #{forward.1} parent=0
    _
  %s5 = ssub.s32 1, %s3
  %s6 = scalar_select 0, %s5, %s3
  $region1: #{forward.1} parent=0
    #allocation2 [shape = 'u8[512]{0}', space=vmem, size = 0x400, scoped, tag = 'output window, operand 0, single buffered']
    #allocation3 [shape = 's32[1]{0}', space=sflag, size = 0x4, scoped, tag = 'scoped memory for forward.1']
    %7 = vsyncpa [#allocation3], 0
    // Predicated region
    $region2: #{forward.1} parent=1 // pred_check
      _
    $region3: #{forward.1} parent=1 // pred_check_branch
      %9 = sbr.rel (0) target = $region5
    $region4: #{forward.1} parent=1 // pred_region
      _
    $region5: #{forward.1} parent=1 // pred_fallthru
      _
    // Predicated region
    $region6: #{forward.1} parent=1 // pred_check
      _
    $region7: #{forward.1} parent=1 // pred_check_branch
      %11 = sbr.rel (0) target = $region9
    $region8: #{forward.1} parent=1 // pred_region
      _
    $region9: #{forward.1} parent=1 // pred_fallthru
      _
    %v12 = vld [vmem:[%s0] sm:$0x7]
    %v13 = vld [vmem:[%s1] sm:$0xf]
    %15 = vset.pattern.permute.xlu0 0
    %16 = vperm.xlu0 %15, %v13
    %v17 = vpop.permute.xlu0 %16
    %v19 = vmul.f32 %v12, %v17
    %vm20 = vcmask 59392
    %v21 = vsel %vm20, %v19, 0.0
    %v22 = vrot.slane %v21, 4
    %v23 = vadd.f32 %v21, %v22
    %v24 = vrot.slane %v23, 2
    %v25 = vadd.f32 %v23, %v24
    %v26 = vrot.slane %v25, 1
    %v27 = vadd.f32 %v25, %v26
    %v28 = vadd.f32 %v27, %v17
    %vm29 = vcmask 60419
    %30 = vst.msk [vmem:[#allocation2 - $0x3] sm:$0x8] %vm29, %v28
    // Predicated region
    $region10: #{forward.1} parent=1 // pred_check
      _
    $region11: #{forward.1} parent=1 // pred_check_branch
      %32 = sbr.rel (0) target = $region13
    $region12: #{forward.1} parent=1 // pred_region
      %s34 = ssub.s32 16, 16
      %35 = vsyncadd [#allocation3], %s34
      %s37 = sshll.u32 [#allocation2], 4
      %s38 = int_to_ptr.vmem [resolvable:$true] %s37
      %40 = dma.vmem_to_hbm [thread:$0]  %s38, 16, %s2, [#allocation3]
    $region13: #{forward.1} parent=1 // pred_fallthru
      _
    // Predicated region
    $region14: #{forward.1} parent=1 // pred_check
      _
    $region15: #{forward.1} parent=1 // pred_check_branch
      %42 = sbr.rel (0) target = $region17
    $region16: #{forward.1} parent=1 // pred_region
      %43 = dma.done [#allocation3], 16
    $region17: #{forward.1} parent=1 // pred_fallthru
      _
    %44 = vsyncpa [#allocation3], 1

</llo_original>
